<compile_context>
chip_gen: v7x
topology: tpu7x:2x2x1
jax: 0.10.0
libtpu: 0.0.40
codegen_flags: <defaults>
</compile_context>

<pallas_src>
import functools

import jax
import jax.numpy as jnp
import numpy as np
from jax.experimental import pallas as pl
from jax.experimental.pallas import tpu as pltpu


# ---------------------------------------------------------------------------
# Kernel
# ---------------------------------------------------------------------------
def _attn_kernel(l_ref, g_ref, w_ref, c_ref, o_ref, m_sc, d_sc, acc_sc, *,
                 normalize, s_valid, s_tile, masked):
    # l_ref / g_ref : (bn, C, St)   C on sublanes, St on lanes
    # w_ref         : (C, 1)        sublane-major 1x1-conv weight
    # c_ref         : (bn, St)      lane-dense attention logits (per S tile)
    # o_ref         : (bn, C)       pooled features (written on last S tile)
    # m_sc, d_sc    : (bn, 1) f32   running max / denominator (softmax)
    # acc_sc        : (bn, C) f32   running weighted sum
    s_idx = pl.program_id(1)
    n_s = pl.num_programs(1)

    @pl.when(s_idx == 0)
    def _init():
        acc_sc[...] = jnp.zeros(acc_sc.shape, jnp.float32)
        if normalize:
            m_sc[...] = jnp.full(m_sc.shape, -jnp.inf, jnp.float32)
            d_sc[...] = jnp.zeros(d_sc.shape, jnp.float32)

    # 1x1 conv to one output channel == weighted sum over C (VPU + XLU).
    x = l_ref[...].astype(jnp.float32) + g_ref[...].astype(jnp.float32)  # (bn,C,St)
    w = w_ref[...].astype(jnp.float32)                                   # (C,1)
    c = jnp.sum(x * w[None, :, :], axis=1)                               # (bn,St)

    if masked:
        # Last S tile may contain padded lanes; exclude them from the softmax.
        lane = jax.lax.broadcasted_iota(jnp.int32, c.shape, 1)
        valid = (s_idx * s_tile + lane) < s_valid
        c = jnp.where(valid, c, jnp.float32(-1e30))

    c_ref[...] = c.astype(c_ref.dtype)

    if normalize:
        # Online softmax across S tiles.
        m_prev = m_sc[...]                                               # (bn,1)
        m_new = jnp.maximum(m_prev, jnp.max(c, axis=1, keepdims=True))
        alpha = jnp.exp(m_prev - m_new)                                  # (bn,1)
        p = jnp.exp(c - m_new)                                           # (bn,St)
        d_sc[...] = alpha * d_sc[...] + jnp.sum(p, axis=1, keepdims=True)
        m_sc[...] = m_new
        a = p                                                            # unnormalized
    else:
        a = jax.nn.sigmoid(c)
        alpha = None

    # Re-read l from its still-resident VMEM input buffer instead of keeping
    # an earlier f32 upcast alive -> lower peak in-kernel VMEM / vreg pressure.
    l32 = l_ref[...].astype(jnp.float32)                                 # (bn,C,St)
    contrib = jnp.sum(a[:, None, :] * l32, axis=2)                       # (bn,C)
    if normalize:
        acc_sc[...] = alpha * acc_sc[...] + contrib
    else:
        acc_sc[...] = acc_sc[...] + contrib

    @pl.when(s_idx == n_s - 1)
    def _finalize():
        if normalize:
            o = acc_sc[...] / d_sc[...]          # exact divide (parity w/ torch)
        else:
            o = acc_sc[...] * jnp.float32(1.0 / s_valid)   # adaptive_avg_pool2d
        o_ref[...] = o.astype(o_ref.dtype)


# ---------------------------------------------------------------------------
# Tiling policy
# ---------------------------------------------------------------------------
def _tpu_chip_info():
    """Best-effort (per-core VMEM bytes, TensorCores per chip)."""
    vmem = 128 << 20
    num_tc = 1
    try:
        vmem = int(pltpu.get_tpu_info().vmem_capacity_bytes)
    except Exception:
        pass
    try:
        if "v7" in jax.devices()[0].device_kind.lower():
            num_tc = 2
    except Exception:
        pass
    if vmem <= (64 << 20):     # v7x-class: smaller per-core VMEM, dual TC
        num_tc = max(num_tc, 2)
    return vmem, num_tc


def _largest_dividing_tile(S, st_max):
    """Largest multiple of 128 that divides S and is <= st_max (0 if none)."""
    best = 0
    for t in range(128, st_max + 1, 128):
        if S % t == 0:
            best = t
    return best


def _choose_tiles(N, C, S, itemsize, num_tc, input_target=None):
    """Pick (bn, n_pad, st, s_pad) for the (batch, spatial) grid."""
    if input_target is None:
        # Purely HBM-bound kernel (~4 flops/elem): amortize the ~0.35us/step
        # overhead with MiB-scale DMAs.  Smaller per-step target on dual-TC
        # v7x (higher HBM BW, smaller per-core VMEM).
        input_target = (6 << 20) if num_tc >= 2 else (12 << 20)
    elems_target = max(1, int(input_target) // (2 * itemsize))   # bn*C*st budget

    # Batch granularity that keeps the 2-D output blocks layout-legal
    # (second-to-last block dim must be a multiple of 8 or the full dim).
    bn_unit = N if N <= 8 else 8

    # ---- spatial tiling ----
    if C * S * bn_unit <= elems_target:
        st, s_pad = S, S                        # whole spatial extent per block
    else:
        st_cap = max(128, (elems_target // (C * bn_unit)) // 128 * 128)
        st_cap = min(st_cap, pl.cdiv(S, 128) * 128)
        st = _largest_dividing_tile(S, st_cap)  # avoid padding when possible
        if st == 0:
            st = st_cap                          # pad S up to a multiple of st
        s_pad = pl.cdiv(S, st) * st

    # ---- batch tiling ----
    if N <= 8:
        bn = N
    else:
        bn = (max(1, elems_target // (C * st)) // 8) * 8
        bn = max(8, min(bn, pl.cdiv(N, 8) * 8))
    n_pad = pl.cdiv(N, bn) * bn

    # ---- dual-TC (v7x): give each core >= 2 pipelined steps ----
    if num_tc >= 2:
        n_blocks, n_s = n_pad // bn, s_pad // st
        if n_blocks * n_s < 4:
            if n_blocks == 1 and N > 8 and bn > 8:
                bn = max(8, (pl.cdiv(N, 4) // 8) * 8)
                n_pad = pl.cdiv(N, bn) * bn
                n_blocks = n_pad // bn
            if n_blocks * (s_pad // st) < 4 and (s_pad // st) == 1 and S >= 256:
                want = min(max(2, -(-4 // max(n_blocks, 1))), S // 128)
                st_cap = max(128, ((S // want) // 128) * 128)
                st = _largest_dividing_tile(S, st_cap) or st_cap
                s_pad = pl.cdiv(S, st) * st

    return bn, n_pad, st, s_pad


# ---------------------------------------------------------------------------
# Wrapper
# ---------------------------------------------------------------------------
def linear_attention_block(l_nchw, g_nchw, w_conv, *, normalize_attn=True,
                           _input_target_bytes=None):
    """l_nchw, g_nchw: (N, C, H, W); w_conv: (1, C, 1, 1) conv weight (no bias).

    Returns (c, g) matching the PyTorch module: c: (N, 1, H, W), g: (N, C).
    """
    N, C, H, W = l_nchw.shape
    S = H * W
    dtype = l_nchw.dtype
    itemsize = jnp.dtype(dtype).itemsize

    vmem_phys, num_tc = _tpu_chip_info()
    bn, n_pad, st, s_pad = _choose_tiles(N, C, S, itemsize, num_tc,
                                         input_target=_input_target_bytes)

    # NCHW -> (N, C, S): free reshape (no transpose, no dtype upcast in HBM).
    l = l_nchw.reshape(N, C, S)
    g = g_nchw.reshape(N, C, S)
    if s_pad != S:                      # only when no dividing S tile exists
        l = jnp.pad(l, ((0, 0), (0, 0), (0, s_pad - S)))
        g = jnp.pad(g, ((0, 0), (0, 0), (0, s_pad - S)))
    if n_pad != N:                      # keep big blocks even for ragged N
        l = jnp.pad(l, ((0, n_pad - N), (0, 0), (0, 0)))
        g = jnp.pad(g, ((0, n_pad - N), (0, 0), (0, 0)))
    w2 = w_conv.reshape(C, 1)           # sublane-major weight -> lane splat

    grid = (n_pad // bn, s_pad // st)

    kernel = functools.partial(_attn_kernel, normalize=normalize_attn,
                               s_valid=S, s_tile=st, masked=(s_pad != S))

    # Scoped-VMEM budget sized to the actual blocks (double-buffered inputs +
    # f32 temporaries), capped below physical VMEM.
    block_elems = bn * C * st
    vmem_needed = (4 * block_elems * itemsize          # l, g double-buffered
                   + 3 * block_elems * 4               # f32 temporaries headroom
                   + 2 * (bn * st + bn * C) * itemsize # output buffers
                   + (2 << 20))                        # scratch + slack
    vmem_limit = int(min(max(vmem_needed, 32 << 20), (vmem_phys * 7) // 8))

    cost = pl.CostEstimate(
        flops=4 * N * C * S,
        transcendentals=N * S,
        bytes_accessed=2 * N * C * S * itemsize + N * (S + C) * itemsize,
    )

    c_out, o_out = pl.pallas_call(
        kernel,
        out_shape=(
            jax.ShapeDtypeStruct((n_pad, s_pad), dtype),   # lane-dense logits
            jax.ShapeDtypeStruct((n_pad, C), dtype),       # pooled features
        ),
        grid_spec=pltpu.PrefetchScalarGridSpec(
            num_scalar_prefetch=0,
            grid=grid,
            in_specs=[
                pl.BlockSpec((bn, C, st), lambda n, s: (n, 0, s)),
                pl.BlockSpec((bn, C, st), lambda n, s: (n, 0, s)),
                pl.BlockSpec((C, 1), lambda n, s: (0, 0)),
            ],
            out_specs=(
                pl.BlockSpec((bn, st), lambda n, s: (n, s)),
                pl.BlockSpec((bn, C), lambda n, s: (n, 0)),
            ),
            scratch_shapes=[
                pltpu.VMEM((bn, 1), jnp.float32),   # running max
                pltpu.VMEM((bn, 1), jnp.float32),   # running denominator
                pltpu.VMEM((bn, C), jnp.float32),   # running weighted sum
            ],
        ),
        compiler_params=pltpu.CompilerParams(
            dimension_semantics=("parallel", "arbitrary"),
            vmem_limit_bytes=vmem_limit),
        cost_estimate=cost,
    )(l, g, w2)

    c_nchw = c_out[:N, :S].reshape(N, 1, H, W)
    g_vec = o_out[:N]
    return c_nchw, g_vec


# ---------------------------------------------------------------------------
# Self-test
# ---------------------------------------------------------------------------
def _reference(l, g, w, normalize):
    N, C, H, W = l.shape
    x = l + g
    c = jnp.einsum("nchw,c->nhw", x, w.reshape(C))[:, None, :, :]   # (N,1,H,W)
    if normalize:
        a = jax.nn.softmax(c.reshape(N, -1), axis=1).reshape(N, 1, H, W)
        gout = jnp.sum((a * l).reshape(N, C, -1), axis=2)
    else:
        a = jax.nn.sigmoid(c)
        gout = jnp.mean((a * l).reshape(N, C, -1), axis=2)
    return c, gout


if __name__ == "__main__":
    key = jax.random.PRNGKey(0)
    k1, k2, k3 = jax.random.split(key, 3)

    # --- small canonical shapes (single-tile path) ---
    N, C, H, W = 2, 4, 16, 16
    l = jax.random.normal(k1, (N, C, H, W), jnp.float32)
    g = jax.random.normal(k2, (N, C, H, W), jnp.float32)
    w = jax.random.normal(k3, (1, C, 1, 1), jnp.float32) * 0.1

    c_out, g_out = linear_attention_block(l, g, w, normalize_attn=True)
    jax.block_until_ready((c_out, g_out))
    c_ref, g_ref = _reference(l, g, w, True)
    assert np.allclose(np.asarray(c_out), np.asarray(c_ref), atol=1e-4, rtol=1e-4)
    assert np.allclose(np.asarray(g_out), np.asarray(g_ref), atol=1e-4, rtol=1e-4)

    c2, g2 = linear_attention_block(l, g, w, normalize_attn=False)
    jax.block_until_ready((c2, g2))
    c2_ref, g2_ref = _reference(l, g, w, False)
    assert np.allclose(np.asarray(c2), np.asarray(c2_ref), atol=1e-4, rtol=1e-4)
    assert np.allclose(np.asarray(g2), np.asarray(g2_ref), atol=1e-4, rtol=1e-4)

    # --- force S tiling + masked last tile (online-softmax path) ---
    N3, C3, H3, W3 = 3, 8, 16, 20            # S = 320 (not a multiple of 128)
    l3 = jax.random.normal(k1, (N3, C3, H3, W3), jnp.float32)
    g3 = jax.random.normal(k2, (N3, C3, H3, W3), jnp.float32)
    w3 = jax.random.normal(k3, (1, C3, 1, 1), jnp.float32) * 0.1
    tiny_target = N3 * C3 * 128 * 2 * 4      # -> 128-lane S tiles, 3 S steps

    c4, g4 = linear_attention_block(l3, g3, w3, normalize_attn=True,
                                    _input_target_bytes=tiny_target)
    jax.block_until_ready((c4, g4))
    c4_ref, g4_ref = _reference(l3, g3, w3, True)
    assert np.allclose(np.asarray(c4), np.asarray(c4_ref), atol=1e-4, rtol=1e-4)
    assert np.allclose(np.asarray(g4), np.asarray(g4_ref), atol=1e-4, rtol=1e-4)

    c5, g5 = linear_attention_block(l3, g3, w3, normalize_attn=False,
                                    _input_target_bytes=tiny_target)
    jax.block_until_ready((c5, g5))
    c5_ref, g5_ref = _reference(l3, g3, w3, False)
    assert np.allclose(np.asarray(c5), np.asarray(c5_ref), atol=1e-4, rtol=1e-4)
    assert np.allclose(np.asarray(g5), np.asarray(g5_ref), atol=1e-4, rtol=1e-4)

    print("KERNEL_OK")
</pallas_src>

<mosaic_0001>
module attributes {stable_mosaic.version = 11 : i64} {
  func.func @_attn_kernel(%arg0: i32, %arg1: i32, %arg2: memref<2x4x256xf32, #tpu.memory_space<vmem>>, %arg3: memref<2x4x256xf32, #tpu.memory_space<vmem>>, %arg4: memref<4x1xf32, #tpu.memory_space<vmem>>, %arg5: memref<2x256xf32, #tpu.memory_space<vmem>>, %arg6: memref<2x4xf32, #tpu.memory_space<vmem>>, %arg7: memref<2x1xf32, #tpu.memory_space<vmem>>, %arg8: memref<2x1xf32, #tpu.memory_space<vmem>>, %arg9: memref<2x4xf32, #tpu.memory_space<vmem>>) attributes {dimension_semantics = [#tpu.dimension_semantics<parallel>, #tpu.dimension_semantics<arbitrary>], iteration_bounds = array<i64: 1, 1>, scalar_prefetch = 0 : i64, scratch_operands = 3 : i64, tpu.core_type = #tpu.core_type<tc>, window_params = [{transform_indices = @transform_0, window_bounds = array<i64: 2, 4, 256>}, {transform_indices = @transform_1, window_bounds = array<i64: 2, 4, 256>}, {pipeline_mode = #tpu.pipeline_mode<synchronous>, transform_indices = @transform_2, window_bounds = array<i64: 4, 1>}, {transform_indices = @transform_3, window_bounds = array<i64: 2, 256>}, {transform_indices = @transform_4, window_bounds = array<i64: 2, 4>}]} {
    %c0_i32 = arith.constant 0 : i32
    %0 = arith.cmpi eq, %arg1, %c0_i32 : i32
    %1 = arith.extui %0 : i1 to i32
    %c0_i32_0 = arith.constant 0 : i32
    %2 = arith.cmpi ne, %1, %c0_i32_0 : i32
    scf.if %2 {
      %cst_30 = arith.constant 0.000000e+00 : f32
      %41 = vector.broadcast %cst_30 : f32 to vector<2x4xf32>
      %c0_31 = arith.constant 0 : index
      %c0_32 = arith.constant 0 : index
      %42 = vector.load %arg9[%c0_31, %c0_32] : memref<2x4xf32, #tpu.memory_space<vmem>>, vector<2x4xf32>
      tpu.vector_store %arg9[%c0_31, %c0_32], %41 {strides = array<i32>} : memref<2x4xf32, #tpu.memory_space<vmem>>, vector<2x4xf32>,
      %cst_33 = arith.constant 0xFF800000 : f32
      %43 = vector.broadcast %cst_33 : f32 to vector<2x1xf32>
      %c0_34 = arith.constant 0 : index
      %c0_35 = arith.constant 0 : index
      %44 = vector.load %arg7[%c0_34, %c0_35] : memref<2x1xf32, #tpu.memory_space<vmem>>, vector<2x1xf32>
      tpu.vector_store %arg7[%c0_34, %c0_35], %43 {strides = array<i32>} : memref<2x1xf32, #tpu.memory_space<vmem>>, vector<2x1xf32>,
      %cst_36 = arith.constant 0.000000e+00 : f32
      %45 = vector.broadcast %cst_36 : f32 to vector<2x1xf32>
      %c0_37 = arith.constant 0 : index
      %c0_38 = arith.constant 0 : index
      %46 = vector.load %arg8[%c0_37, %c0_38] : memref<2x1xf32, #tpu.memory_space<vmem>>, vector<2x1xf32>
      tpu.vector_store %arg8[%c0_37, %c0_38], %45 {strides = array<i32>} : memref<2x1xf32, #tpu.memory_space<vmem>>, vector<2x1xf32>,
    } else {
    }
    %c0 = arith.constant 0 : index
    %c0_1 = arith.constant 0 : index
    %c0_2 = arith.constant 0 : index
    %3 = vector.load %arg2[%c0, %c0_1, %c0_2] : memref<2x4x256xf32, #tpu.memory_space<vmem>>, vector<2x4x256xf32>
    %c0_3 = arith.constant 0 : index
    %c0_4 = arith.constant 0 : index
    %c0_5 = arith.constant 0 : index
    %4 = vector.load %arg3[%c0_3, %c0_4, %c0_5] : memref<2x4x256xf32, #tpu.memory_space<vmem>>, vector<2x4x256xf32>
    %5 = arith.addf %3, %4 : vector<2x4x256xf32>
    %c0_6 = arith.constant 0 : index
    %c0_7 = arith.constant 0 : index
    %6 = vector.load %arg4[%c0_6, %c0_7] : memref<4x1xf32, #tpu.memory_space<vmem>>, vector<4x1xf32>
    %7 = vector.shape_cast %6 : vector<4x1xf32> to vector<1x4x1xf32>
    %8 = vector.broadcast %7 : vector<1x4x1xf32> to vector<2x4x256xf32>
    %9 = arith.mulf %5, %8 : vector<2x4x256xf32>
    %cst = arith.constant dense<0.000000e+00> : vector<2x256xf32>
    %10 = vector.multi_reduction <add>, %9, %cst [1] : vector<2x4x256xf32> to vector<2x256xf32>
    %c0_8 = arith.constant 0 : index
    %c0_9 = arith.constant 0 : index
    %11 = vector.load %arg5[%c0_8, %c0_9] : memref<2x256xf32, #tpu.memory_space<vmem>>, vector<2x256xf32>
    tpu.vector_store %arg5[%c0_8, %c0_9], %10 {strides = array<i32>} : memref<2x256xf32, #tpu.memory_space<vmem>>, vector<2x256xf32>,
    %c0_10 = arith.constant 0 : index
    %c0_11 = arith.constant 0 : index
    %12 = vector.load %arg7[%c0_10, %c0_11] : memref<2x1xf32, #tpu.memory_space<vmem>>, vector<2x1xf32>
    %cst_12 = arith.constant dense<0xFF800000> : vector<2xf32>
    %13 = vector.multi_reduction <maximumf>, %10, %cst_12 [1] : vector<2x256xf32> to vector<2xf32>
    %14 = vector.shape_cast %13 : vector<2xf32> to vector<2x1xf32>
    %15 = arith.maximumf %12, %14 : vector<2x1xf32>
    %16 = arith.subf %12, %15 : vector<2x1xf32>
    %17 = math.exp %16 : vector<2x1xf32>
    %18 = vector.broadcast %15 : vector<2x1xf32> to vector<2x256xf32>
    %19 = arith.subf %10, %18 : vector<2x256xf32>
    %20 = math.exp %19 : vector<2x256xf32>
    %c0_13 = arith.constant 0 : index
    %c0_14 = arith.constant 0 : index
    %21 = vector.load %arg8[%c0_13, %c0_14] : memref<2x1xf32, #tpu.memory_space<vmem>>, vector<2x1xf32>
    %22 = arith.mulf %17, %21 : vector<2x1xf32>
    %cst_15 = arith.constant dense<0.000000e+00> : vector<2xf32>
    %23 = vector.multi_reduction <add>, %20, %cst_15 [1] : vector<2x256xf32> to vector<2xf32>
    %24 = vector.shape_cast %23 : vector<2xf32> to vector<2x1xf32>
    %25 = arith.addf %22, %24 : vector<2x1xf32>
    %c0_16 = arith.constant 0 : index
    %c0_17 = arith.constant 0 : index
    %26 = vector.load %arg8[%c0_16, %c0_17] : memref<2x1xf32, #tpu.memory_space<vmem>>, vector<2x1xf32>
    tpu.vector_store %arg8[%c0_16, %c0_17], %25 {strides = array<i32>} : memref<2x1xf32, #tpu.memory_space<vmem>>, vector<2x1xf32>,
    %c0_18 = arith.constant 0 : index
    %c0_19 = arith.constant 0 : index
    %27 = vector.load %arg7[%c0_18, %c0_19] : memref<2x1xf32, #tpu.memory_space<vmem>>, vector<2x1xf32>
    tpu.vector_store %arg7[%c0_18, %c0_19], %15 {strides = array<i32>} : memref<2x1xf32, #tpu.memory_space<vmem>>, vector<2x1xf32>,
    %c0_20 = arith.constant 0 : index
    %c0_21 = arith.constant 0 : index
    %c0_22 = arith.constant 0 : index
    %28 = vector.load %arg2[%c0_20, %c0_21, %c0_22] : memref<2x4x256xf32, #tpu.memory_space<vmem>>, vector<2x4x256xf32>
    %29 = vector.shape_cast %20 : vector<2x256xf32> to vector<2x1x256xf32>
    %30 = vector.broadcast %29 : vector<2x1x256xf32> to vector<2x4x256xf32>
    %31 = arith.mulf %30, %28 : vector<2x4x256xf32>
    %cst_23 = arith.constant dense<0.000000e+00> : vector<2x4xf32>
    %32 = vector.multi_reduction <add>, %31, %cst_23 [2] : vector<2x4x256xf32> to vector<2x4xf32>
    %c0_24 = arith.constant 0 : index
    %c0_25 = arith.constant 0 : index
    %33 = vector.load %arg9[%c0_24, %c0_25] : memref<2x4xf32, #tpu.memory_space<vmem>>, vector<2x4xf32>
    %34 = vector.broadcast %17 : vector<2x1xf32> to vector<2x4xf32>
    %35 = arith.mulf %34, %33 : vector<2x4xf32>
    %36 = arith.addf %35, %32 : vector<2x4xf32>
    %c0_26 = arith.constant 0 : index
    %c0_27 = arith.constant 0 : index
    %37 = vector.load %arg9[%c0_26, %c0_27] : memref<2x4xf32, #tpu.memory_space<vmem>>, vector<2x4xf32>
    tpu.vector_store %arg9[%c0_26, %c0_27], %36 {strides = array<i32>} : memref<2x4xf32, #tpu.memory_space<vmem>>, vector<2x4xf32>,
    %c0_i32_28 = arith.constant 0 : i32
    %38 = arith.cmpi eq, %arg1, %c0_i32_28 : i32
    %39 = arith.extui %38 : i1 to i32
    %c0_i32_29 = arith.constant 0 : i32
    %40 = arith.cmpi ne, %39, %c0_i32_29 : i32
    scf.if %40 {
      %c0_30 = arith.constant 0 : index
      %c0_31 = arith.constant 0 : index
      %41 = vector.load %arg9[%c0_30, %c0_31] : memref<2x4xf32, #tpu.memory_space<vmem>>, vector<2x4xf32>
      %c0_32 = arith.constant 0 : index
      %c0_33 = arith.constant 0 : index
      %42 = vector.load %arg8[%c0_32, %c0_33] : memref<2x1xf32, #tpu.memory_space<vmem>>, vector<2x1xf32>
      %43 = vector.broadcast %42 : vector<2x1xf32> to vector<2x4xf32>
      %44 = arith.divf %41, %43 : vector<2x4xf32>
      %c0_34 = arith.constant 0 : index
      %c0_35 = arith.constant 0 : index
      %45 = vector.load %arg6[%c0_34, %c0_35] : memref<2x4xf32, #tpu.memory_space<vmem>>, vector<2x4xf32>
      tpu.vector_store %arg6[%c0_34, %c0_35], %44 {strides = array<i32>} : memref<2x4xf32, #tpu.memory_space<vmem>>, vector<2x4xf32>,
    } else {
    }
    return
  }
  func.func @transform_0(%arg0: i32, %arg1: i32) -> (i32, i32, i32) {
    %c0_i32 = arith.constant 0 : i32
    %c0_i32_0 = arith.constant 0 : i32
    return %arg0, %c0_i32, %arg1 : i32, i32, i32
  }
  func.func @transform_1(%arg0: i32, %arg1: i32) -> (i32, i32, i32) {
    %c0_i32 = arith.constant 0 : i32
    %c0_i32_0 = arith.constant 0 : i32
    return %arg0, %c0_i32, %arg1 : i32, i32, i32
  }
  func.func @transform_2(%arg0: i32, %arg1: i32) -> (i32, i32) {
    %c0_i32 = arith.constant 0 : i32
    %c0_i32_0 = arith.constant 0 : i32
    %c0_i32_1 = arith.constant 0 : i32
    return %c0_i32, %c0_i32_0 : i32, i32
  }
  func.func @transform_3(%arg0: i32, %arg1: i32) -> (i32, i32) {
    %c0_i32 = arith.constant 0 : i32
    return %arg0, %arg1 : i32, i32
  }
  func.func @transform_4(%arg0: i32, %arg1: i32) -> (i32, i32) {
    %c0_i32 = arith.constant 0 : i32
    %c0_i32_0 = arith.constant 0 : i32
    return %arg0, %c0_i32 : i32, i32
  }
}

</mosaic_0001>

<llo_original>
// kernel: tpu_custom_call.1
$region0: #{tpu_custom_call.1}
  #allocation0 [shape = 'u32[]', space=smem, size = 0x4, offset = 0x4, fixed_abs, tag = 'smem constant byte address 0x4 - core index']
  #allocation1 [shape = 'u32[144,128]{1,0:T(1,128)}', space=vmem, size = 0x12000, scoped, tag = 'internal scratch']
  #allocation2 [shape = 'f32[2,1]{1,0:T(2,128)}', space=vmem, size = 0x400, scoped, tag = 'scratch operand']
  #allocation3 [shape = 'f32[2,1]{1,0:T(2,128)}', space=vmem, size = 0x400, scoped, tag = 'scratch operand']
  #allocation4 [shape = 'f32[2,4]{1,0:T(2,128)}', space=vmem, size = 0x400, scoped, tag = 'scratch operand']
  %s0 = inlined_call_operand.hbm [shape: f32[2,4,256], index: 0, kind: input, shape index: {}]
  %s1 = inlined_call_operand.hbm [shape: f32[2,4,256], index: 1, kind: input, shape index: {}]
  %s2 = inlined_call_operand.vmem [shape: f32[4,1], index: 2, kind: input, shape index: {}]
  %s3 = inlined_call_operand.hbm [shape: f32[2,256], index: 3, kind: output, shape index: {0}]
  %s4 = inlined_call_operand.hbm [shape: f32[2,4], index: 4, kind: output, shape index: {1}]
  %5 = xla_tuple %s3, %s4
  %s6 = sld [smem:[#allocation0]]
  $region46: #{tpu_custom_call.1} parent=0
    _
  %s8 = ssub.s32 1, %s6
  %s9 = scalar_select 0, %s8, %s6
  $region1: #{tpu_custom_call.1} parent=0
    #allocation5 [shape = 'u8[8192]{0}', space=vmem, size = 0x2000, scoped, tag = 'input window, operand 0, single buffered']
    #allocation6 [shape = 's32[1]{0}', space=sflag, size = 0x4, scoped, tag = 'scoped memory for tpu_custom_call.1']
    #allocation7 [shape = 's32[1]{0}', space=sflag, size = 0x4, scoped, tag = 'scoped memory for tpu_custom_call.1']
    #allocation8 [shape = 'u8[8192]{0}', space=vmem, size = 0x2000, scoped, tag = 'input window, operand 1, single buffered']
    #allocation9 [shape = 's32[1]{0}', space=sflag, size = 0x4, scoped, tag = 'scoped memory for tpu_custom_call.1']
    #allocation10 [shape = 'u8[2048]{0}', space=vmem, size = 0x800, scoped, tag = 'output window, operand 0, single buffered']
    #allocation11 [shape = 'u8[1024]{0}', space=vmem, size = 0x400, scoped, tag = 'output window, operand 1, single buffered']
    #allocation12 [shape = 's32[1]{0}', space=sflag, size = 0x4, scoped, tag = 'scoped memory for tpu_custom_call.1']
    %10 = vsyncpa [#allocation6], 0
    %11 = vsyncpa [#allocation9], 0
    %12 = vsyncpa [#allocation7], 0
    %13 = vsyncpa [#allocation12], 0
    // Predicated region
    $region2: #{tpu_custom_call.1} parent=1 // pred_check
      _
    $region3: #{tpu_custom_call.1} parent=1 // pred_check_branch
      %15 = sbr.rel (0) target = $region5
    $region4: #{tpu_custom_call.1} parent=1 // pred_region
      %s17 = ssub.s32 256, 256
      %18 = vsyncadd [#allocation6], %s17
      %s19 = sshll.u32 [#allocation5], 4
      %s20 = int_to_ptr.vmem [resolvable:$true] %s19
      %25 = dma.hbm_to_vmem [thread:$0]  %s0, 256, %s20, [#allocation6], 128, 128, 8
    $region5: #{tpu_custom_call.1} parent=1 // pred_fallthru
      _
    // Predicated region
    $region6: #{tpu_custom_call.1} parent=1 // pred_check
      _
    $region7: #{tpu_custom_call.1} parent=1 // pred_check_branch
      %27 = sbr.rel (0) target = $region9
    $region8: #{tpu_custom_call.1} parent=1 // pred_region
      %s29 = ssub.s32 256, 256
      %30 = vsyncadd [#allocation9], %s29
      %s31 = sshll.u32 [#allocation8], 4
      %s32 = int_to_ptr.vmem [resolvable:$true] %s31
      %37 = dma.hbm_to_vmem [thread:$0]  %s1, 256, %s32, [#allocation9], 128, 128, 8
    $region9: #{tpu_custom_call.1} parent=1 // pred_fallthru
      _
    // Predicated region
    $region10: #{tpu_custom_call.1} parent=1 // pred_check
      _
    $region11: #{tpu_custom_call.1} parent=1 // pred_check_branch
      %39 = sbr.rel (0) target = $region13
    $region12: #{tpu_custom_call.1} parent=1 // pred_region
      _
    $region13: #{tpu_custom_call.1} parent=1 // pred_fallthru
      _
    // Predicated region
    $region14: #{tpu_custom_call.1} parent=1 // pred_check
      _
    $region15: #{tpu_custom_call.1} parent=1 // pred_check_branch
      %41 = sbr.rel (0) target = $region17
    $region16: #{tpu_custom_call.1} parent=1 // pred_region
      %42 = dma.done [#allocation6], 256
    $region17: #{tpu_custom_call.1} parent=1 // pred_fallthru
      _
    // Predicated region
    $region18: #{tpu_custom_call.1} parent=1 // pred_check
      _
    $region19: #{tpu_custom_call.1} parent=1 // pred_check_branch
      %44 = sbr.rel (0) target = $region21
    $region20: #{tpu_custom_call.1} parent=1 // pred_region
      %45 = dma.done [#allocation9], 256
    $region21: #{tpu_custom_call.1} parent=1 // pred_fallthru
      _
    %p46 = scmp.eq.s32.totalorder 0, 0
    // Predicated region
    $region22: #{tpu_custom_call.1} parent=1 // pred_check
      %p47 = pneg %p46
    $region23: #{tpu_custom_call.1} parent=1 // pred_check_branch
      %49 = sbr.rel (%p47) target = $region25
    $region24: #{tpu_custom_call.1} parent=1 // pred_region
      %vm50 = vcmask 25600
      %51 = vst.msk [vmem:[#allocation4] sm:$0x3] %vm50, 0.0
      %vm52 = vcmask 1024
      %53 = vst.msk [vmem:[#allocation2] sm:$0x3] %vm52, -inf
      %54 = vst.msk [vmem:[#allocation3] sm:$0x3] %vm52, 0.0
    $region25: #{tpu_custom_call.1} parent=1 // pred_fallthru
      _
    %v55 = vld [vmem:[#allocation5] sm:$0xff]
    %v56 = vld [vmem:[#allocation5 + $0x8] sm:$0xff]
    %v57 = vld [vmem:[#allocation8] sm:$0xff]
    %v58 = vld [vmem:[#allocation8 + $0x8] sm:$0xff]
    %v59 = vadd.f32 %v55, %v57
    %v60 = vadd.f32 %v56, %v58
    %v61 = vld [vmem:[%s2] sm:$0xf]
    %63 = vset.pattern.permute.xlu0 0
    %64 = vperm.xlu0 %63, %v61
    %v65 = vpop.permute.xlu0 %64
    %v67 = vunpack.c.l.s4 839922192
    %v68 = vunpack.c.0.s8 %v67
    %v69 = vlaneseq
    %v70 = vshrl.u32 %v69, 7
    %v71 = vsub.s32 %v68, %v70
    %v72 = vrot.slane %v65, %v71
    %v74 = vmul.f32 %v59, %v72
    %v75 = vmul.f32 %v60, %v72
    %v78 = vcombine.high %v74, %v74
    %v79 = vcombine.high %v75, %v75
    %vm82 = vcmask 1043456
    %v83 = vsel %vm82, %v74, 0.0
    %v84 = vrot.slane %v83, 4
    %v85 = vadd.f32 %v83, %v84
    %v86 = vrot.slane %v85, 2
    %v87 = vadd.f32 %v85, %v86
    %v88 = vrot.slane %v87, 1
    %v89 = vadd.f32 %v87, %v88
    %v90 = vsel %vm82, %v78, 0.0
    %v91 = vrot.slane %v90, 4
    %v92 = vadd.f32 %v90, %v91
    %v93 = vrot.slane %v92, 2
    %v94 = vadd.f32 %v92, %v93
    %v95 = vrot.slane %v94, 1
    %v96 = vadd.f32 %v94, %v95
    %v97 = vsel %vm82, %v75, 0.0
    %v98 = vrot.slane %v97, 4
    %v99 = vadd.f32 %v97, %v98
    %v100 = vrot.slane %v99, 2
    %v101 = vadd.f32 %v99, %v100
    %v102 = vrot.slane %v101, 1
    %v103 = vadd.f32 %v101, %v102
    %v104 = vsel %vm82, %v79, 0.0
    %v105 = vrot.slane %v104, 4
    %v106 = vadd.f32 %v104, %v105
    %v107 = vrot.slane %v106, 2
    %v108 = vadd.f32 %v106, %v107
    %v109 = vrot.slane %v108, 1
    %v110 = vadd.f32 %v108, %v109
    %v115 = vcombine.low %v89, %v96
    %v117 = vunpack.c.l.s4 1983009808
    %v118 = vunpack.c.0.s8 %v117
    %v119 = vlaneseq
    %v120 = vshrl.u32 %v119, 7
    %v121 = vsub.s32 %v118, %v120
    %v122 = vrot.slane %v115, %v121
    %v123 = vcombine.low %v103, %v110
    %v125 = vunpack.c.l.s4 1983009808
    %v126 = vunpack.c.0.s8 %v125
    %v127 = vlaneseq
    %v128 = vshrl.u32 %v127, 7
    %v129 = vsub.s32 %v126, %v128
    %v130 = vrot.slane %v123, %v129
    %vm131 = vcmask 1044484
    %v132 = vsel %vm131, %v122, %v122
    %vm133 = vcmask 1046534
    %v134 = vsel %vm133, %v122, %v132
    %v135 = vrot.slane %v130, 7
    %vm136 = vcmask 1041409
    %v137 = vsel %vm136, %v135, %v134
    %vm138 = vcmask 1043459
    %v139 = vsel %vm138, %v135, %v137
    %vm140 = vcmask 1045509
    %v141 = vsel %vm140, %v135, %v139
    %vm142 = vcmask 1047559
    %v143 = vsel %vm142, %v135, %v141
    %145 = vst [vmem:[#allocation10] sm:$0xf] %v143
    %v146 = vld [vmem:[#allocation2] sm:$0x3]
    %v147 = vsel %vm136, %v103, %v89
    %v148 = vsel %vm136, %v110, %v96
    %vm151 = vcmask 1041408
    %v152 = vsel %vm151, %v147, -inf
    %v153 = vsel %vm151, %v148, -inf
    %v154 = vmax.f32 %v152, %v153
    %155 = vmax.xlane.f32.xlu0 %v154
    %v156 = vpop.xlane.xlu0 %155
    %v157 = vmax.f32 %v146, %v156
    %v158 = vsub.f32 %v146, %v157
    %v159 = vmul.f32 %v158, 1.442695
    %v160 = vpow.pop %v159
    %162 = vset.pattern.permute.xlu0 0
    %163 = vperm.xlu0 %162, %v157
    %v164 = vpop.permute.xlu0 %163
    %v165 = vrot.slane %v164, 1
    %v168 = vsub.f32 %v89, %v164
    %v169 = vsub.f32 %v96, %v164
    %v170 = vsub.f32 %v103, %v165
    %v171 = vsub.f32 %v110, %v165
    %v172 = vmul.f32 %v168, 1.442695
    %v173 = vpow.pop %v172
    %v174 = vmul.f32 %v169, 1.442695
    %v175 = vpow.pop %v174
    %v176 = vmul.f32 %v170, 1.442695
    %v177 = vpow.pop %v176
    %v178 = vmul.f32 %v171, 1.442695
    %v179 = vpow.pop %v178
    %v180 = vld [vmem:[#allocation3] sm:$0x3]
    %v181 = vmul.f32 %v160, %v180
    %v186 = vrot.slane %v177, 7
    %v187 = vsel %vm136, %v186, %v173
    %v188 = vrot.slane %v179, 7
    %v189 = vsel %vm136, %v188, %v175
    %v192 = vsel %vm151, %v187, 0.0
    %v193 = vsel %vm151, %v189, 0.0
    %v194 = vadd.f32 %v192, %v193
    %195 = vadd.xlane.f32.xlu0 %v194
    %v196 = vpop.xlane.xlu0 %195
    %v197 = vadd.f32 %v181, %v196
    %vm198 = vcmask 1024
    %199 = vst.msk [vmem:[#allocation3] sm:$0x3] %vm198, %v197
    %200 = vst.msk [vmem:[#allocation2] sm:$0x3] %vm198, %v157
    %v201 = vld [vmem:[#allocation5] sm:$0xff]
    %v202 = vld [vmem:[#allocation5 + $0x8] sm:$0xff]
    %v203 = vlaneseq
    %v204 = vshrl.u32 %v203, 7
    %v205 = vsub.s32 0, %v204
    %v206 = vrot.slane %v173, %v205
    %v207 = vlaneseq
    %v208 = vshrl.u32 %v207, 7
    %v209 = vsub.s32 0, %v208
    %v210 = vrot.slane %v175, %v209
    %v211 = vlaneseq
    %v212 = vshrl.u32 %v211, 7
    %v213 = vsub.s32 0, %v212
    %v214 = vrot.slane %v177, %v213
    %v215 = vlaneseq
    %v216 = vshrl.u32 %v215, 7
    %v217 = vsub.s32 0, %v216
    %v218 = vrot.slane %v179, %v217
    %v221 = vcombine.high %v201, %v201
    %v222 = vcombine.high %v202, %v202
    %v225 = vmul.f32 %v206, %v201
    %v226 = vmul.f32 %v210, %v221
    %v227 = vmul.f32 %v214, %v202
    %v228 = vmul.f32 %v218, %v222
    %v229 = vsel %vm82, %v225, 0.0
    %v230 = vsel %vm82, %v226, 0.0
    %v231 = vadd.f32 %v229, %v230
    %232 = vadd.xlane.f32.xlu0 %v231
    %v233 = vpop.xlane.xlu0 %232
    %v234 = vsel %vm82, %v227, 0.0
    %v235 = vsel %vm82, %v228, 0.0
    %v236 = vadd.f32 %v234, %v235
    %237 = vadd.xlane.f32.xlu0 %v236
    %v238 = vpop.xlane.xlu0 %237
    %v239 = vld [vmem:[#allocation4] sm:$0x3]
    %241 = vset.pattern.permute.xlu0 0
    %242 = vperm.xlu0 %241, %v160
    %v243 = vpop.permute.xlu0 %242
    %v245 = vmul.f32 %v243, %v239
    %v248 = vlaneseq
    %v249 = vand.u32 %v248, 127
    %v250 = vlaneseq
    %v251 = vshrl.u32 %v250, 7
    %v252 = vsub.s32 %v249, %v251
    %v253 = vrot.slane %v233, %v252
    %v254 = vlaneseq
    %v255 = vshrl.u32 %v254, 7
    %v256 = vsub.s32 %v249, %v255
    %v257 = vrot.slane %v238, %v256
    %v258 = vsel %vm136, %v257, %v253
    %v260 = vadd.f32 %v245, %v258
    %vm261 = vcmask 25600
    %262 = vst.msk [vmem:[#allocation4] sm:$0x3] %vm261, %v260
    // Predicated region
    $region26: #{tpu_custom_call.1} parent=1 // pred_check
      %p263 = pneg %p46
    $region27: #{tpu_custom_call.1} parent=1 // pred_check_branch
      %265 = sbr.rel (%p263) target = $region29
    $region28: #{tpu_custom_call.1} parent=1 // pred_region
      %v266 = vld [vmem:[#allocation4] sm:$0x3]
      %v267 = vld [vmem:[#allocation3] sm:$0x3]
      %269 = vset.pattern.permute.xlu0 0
      %270 = vperm.xlu0 %269, %v267
      %v271 = vpop.permute.xlu0 %270
      %v273 = vrcp.pop %v271
      %v274 = vmul.f32 %v266, %v273
      %275 = vst.msk [vmem:[#allocation11] sm:$0x3] %vm261, %v274
    $region29: #{tpu_custom_call.1} parent=1 // pred_fallthru
      _
    // Predicated region
    $region30: #{tpu_custom_call.1} parent=1 // pred_check
      _
    $region31: #{tpu_custom_call.1} parent=1 // pred_check_branch
      %277 = sbr.rel (0) target = $region33
    $region32: #{tpu_custom_call.1} parent=1 // pred_region
      %s279 = ssub.s32 64, 64
      %280 = vsyncadd [#allocation7], %s279
      %s282 = sshll.u32 [#allocation10], 4
      %s283 = int_to_ptr.vmem [resolvable:$true] %s282
      %285 = dma.vmem_to_hbm [thread:$0]  %s283, 64, %s3, [#allocation7]
    $region33: #{tpu_custom_call.1} parent=1 // pred_fallthru
      _
    // Predicated region
    $region34: #{tpu_custom_call.1} parent=1 // pred_check
      _
    $region35: #{tpu_custom_call.1} parent=1 // pred_check_branch
      %287 = sbr.rel (0) target = $region37
    $region36: #{tpu_custom_call.1} parent=1 // pred_region
      %s289 = ssub.s32 32, 32
      %290 = vsyncadd [#allocation12], %s289
      %s292 = sshll.u32 [#allocation11], 4
      %s293 = int_to_ptr.vmem [resolvable:$true] %s292
      %295 = dma.vmem_to_hbm [thread:$0]  %s293, 32, %s4, [#allocation12]
    $region37: #{tpu_custom_call.1} parent=1 // pred_fallthru
      _
    // Predicated region
    $region38: #{tpu_custom_call.1} parent=1 // pred_check
      _
    $region39: #{tpu_custom_call.1} parent=1 // pred_check_branch
      %297 = sbr.rel (0) target = $region41
    $region40: #{tpu_custom_call.1} parent=1 // pred_region
      %298 = dma.done [#allocation7], 64
    $region41: #{tpu_custom_call.1} parent=1 // pred_fallthru
      _
    // Predicated region
    $region42: #{tpu_custom_call.1} parent=1 // pred_check
      _
    $region43: #{tpu_custom_call.1} parent=1 // pred_check_branch
      %300 = sbr.rel (0) target = $region45
    $region44: #{tpu_custom_call.1} parent=1 // pred_region
      %301 = dma.done [#allocation12], 32
    $region45: #{tpu_custom_call.1} parent=1 // pred_fallthru
      _
    %302 = vsyncpa [#allocation6], 1
    %303 = vsyncpa [#allocation9], 1
    %304 = vsyncpa [#allocation7], 1
    %305 = vsyncpa [#allocation12], 1

</llo_original>
